<compile_context>
chip_gen: v6e
topology: v6e:2x2x1
jax: 0.10.0
libtpu: 0.0.40
codegen_flags: <defaults>
</compile_context>

<pallas_src>
import functools

import jax
import jax.numpy as jnp
from jax.experimental import pallas as pl
from jax.experimental.pallas import tpu as pltpu


def _layernorm_kernel(x_ref, w_ref, b_ref, o_ref, *, eps, d_model):
    # x_ref: (tile_rows, d_model); w_ref/b_ref: (1, d_model) already f32.
    xf = x_ref[...].astype(jnp.float32)

    inv_d = 1.0 / d_model
    # Two-pass, numerically stable statistics over the lane (d_model) axis —
    # identical formulation to the PyTorch reference.
    mean = jnp.sum(xf, axis=-1, keepdims=True) * inv_d        # (tile_rows, 1)
    xc = xf - mean
    var = jnp.sum(xc * xc, axis=-1, keepdims=True) * inv_d    # biased variance

    # One exact reciprocal per row (cheap: tile_rows values per step) instead
    # of d_model per-element divides per row.
    inv = pl.reciprocal(var + eps, approx=False)               # (tile_rows, 1)

    # Matches the reference: w * (x - mean) / (var + eps) + b
    y = xc * inv * w_ref[...] + b_ref[...]
    o_ref[...] = y.astype(o_ref.dtype)


def _vmem_budget_bytes():
    # Generation-aware VMEM capacity; conservative v7x value if unavailable.
    try:
        info = pltpu.get_tpu_info()
        cap = getattr(info, "vmem_capacity_bytes", None)
        if cap:
            return int(cap)
    except Exception:
        pass
    return 64 * 1024 * 1024


def _pick_tile_rows(rows, d_model, itemsize, vmem_budget):
    # Target ~4 MiB of HBM bytes per tile (in x's own dtype) so the ~0.35 us
    # per-grid-step overhead stays hidden even at v7x's ~3.2 TB/s, while
    # keeping 2x double-buffered in + out plus ~3x f32 in-kernel temporaries
    # under ~60% of the scoped VMEM budget.
    target_hbm_bytes = 4 * 1024 * 1024
    tr = max(16, target_hbm_bytes // (itemsize * max(d_model, 1)))

    def vmem_need(t):
        io = 2 * 2 * t * d_model * itemsize    # in + out, double-buffered
        tmp = 3 * t * d_model * 4              # f32 temporaries in the kernel
        return io + tmp

    while tr > 16 and vmem_need(tr) > int(0.6 * vmem_budget):
        tr //= 2

    tr = max(16, tr - (tr % 16))               # sublane-pack friendly (bf16: 16)
    rows_16 = ((rows + 15) // 16) * 16         # don't exceed the problem size
    return max(16, min(tr, rows_16))


def layernorm(x, w, b, *, eps=1e-12, tile_rows=None):
    """LayerNorm (non-sqrt reference variant) over the last axis of x."""
    orig_shape = x.shape
    d_model = orig_shape[-1]
    x2 = x.reshape(-1, d_model)
    rows = x2.shape[0]
    itemsize = jnp.dtype(x.dtype).itemsize

    vmem_budget = _vmem_budget_bytes()
    if tile_rows is None:
        tile_rows = _pick_tile_rows(rows, d_model, itemsize, vmem_budget)

    # Pre-cast params to f32 in the wrapper: no per-step casts in the kernel,
    # and these constant-index blocks stay resident in VMEM across the grid.
    w2 = w.astype(jnp.float32).reshape(1, d_model)
    b2 = b.astype(jnp.float32).reshape(1, d_model)

    # No input padding: Pallas clips the partial last row-block; padded rows
    # are never stored back (there are no cross-row reductions).
    grid = (pl.cdiv(rows, tile_rows),)

    vmem_limit = min(int(0.75 * vmem_budget), 100 * 1024 * 1024)

    cost = pl.CostEstimate(
        flops=7 * rows * d_model,
        transcendentals=0,
        bytes_accessed=2 * rows * d_model * itemsize + 2 * d_model * 4,
    )

    out = pl.pallas_call(
        functools.partial(_layernorm_kernel, eps=eps, d_model=d_model),
        out_shape=jax.ShapeDtypeStruct((rows, d_model), x.dtype),
        grid_spec=pltpu.PrefetchScalarGridSpec(
            num_scalar_prefetch=0,
            grid=grid,
            in_specs=[
                pl.BlockSpec((tile_rows, d_model), lambda i: (i, 0)),
                pl.BlockSpec((1, d_model), lambda i: (0, 0)),  # VMEM-resident
                pl.BlockSpec((1, d_model), lambda i: (0, 0)),  # VMEM-resident
            ],
            out_specs=pl.BlockSpec((tile_rows, d_model), lambda i: (i, 0)),
        ),
        compiler_params=pltpu.CompilerParams(
            dimension_semantics=("parallel",),
            vmem_limit_bytes=vmem_limit,
        ),
        cost_estimate=cost,
    )(x2, w2, b2)

    return out.reshape(orig_shape)


if __name__ == "__main__":
    batch, seq, d_model = 2, 8, 32
    key = jax.random.PRNGKey(0)
    x = jax.random.normal(key, (batch, seq, d_model), dtype=jnp.float32)

    # Deterministic parameter init matching nn.Parameter(torch.ones / torch.zeros)
    w = jnp.ones((d_model,), dtype=jnp.float32)
    b = jnp.zeros((d_model,), dtype=jnp.float32)

    out = layernorm(x, w, b, eps=1e-12)
    out = jax.block_until_ready(out)

    # Reference check in plain JAX (same non-sqrt formulation as the PyTorch module).
    mean = jnp.mean(x, axis=-1, keepdims=True)
    var = jnp.mean((x - mean) ** 2, axis=-1, keepdims=True)
    ref = w * (x - mean) / (var + 1e-12) + b
    assert jnp.allclose(out, ref, atol=1e-4, rtol=1e-4), "mismatch vs reference"

    print("KERNEL_OK")
</pallas_src>

<mosaic_0001>
module attributes {stable_mosaic.version = 11 : i64} {
  func.func @_layernorm_kernel(%arg0: i32, %arg1: memref<16x32xf32, #tpu.memory_space<vmem>>, %arg2: memref<1x32xf32, #tpu.memory_space<vmem>>, %arg3: memref<1x32xf32, #tpu.memory_space<vmem>>, %arg4: memref<16x32xf32, #tpu.memory_space<vmem>>) attributes {dimension_semantics = [#tpu.dimension_semantics<parallel>], iteration_bounds = array<i64: 1>, scalar_prefetch = 0 : i64, scratch_operands = 0 : i64, tpu.core_type = #tpu.core_type<tc>, window_params = [{transform_indices = @transform_0, window_bounds = array<i64: 16, 32>}, {pipeline_mode = #tpu.pipeline_mode<synchronous>, transform_indices = @transform_1, window_bounds = array<i64: 1, 32>}, {pipeline_mode = #tpu.pipeline_mode<synchronous>, transform_indices = @transform_2, window_bounds = array<i64: 1, 32>}, {transform_indices = @transform_3, window_bounds = array<i64: 16, 32>}]} {
    %c0 = arith.constant 0 : index
    %c0_0 = arith.constant 0 : index
    %0 = vector.load %arg1[%c0, %c0_0] : memref<16x32xf32, #tpu.memory_space<vmem>>, vector<16x32xf32>
    %cst = arith.constant dense<0.000000e+00> : vector<16xf32>
    %1 = vector.multi_reduction <add>, %0, %cst [1] : vector<16x32xf32> to vector<16xf32>
    %2 = vector.shape_cast %1 : vector<16xf32> to vector<16x1xf32>
    %cst_1 = arith.constant 3.125000e-02 : f32
    %3 = vector.broadcast %cst_1 : f32 to vector<16x1xf32>
    %4 = arith.mulf %2, %3 : vector<16x1xf32>
    %5 = vector.broadcast %4 : vector<16x1xf32> to vector<16x32xf32>
    %6 = arith.subf %0, %5 : vector<16x32xf32>
    %7 = arith.mulf %6, %6 : vector<16x32xf32>
    %cst_2 = arith.constant dense<0.000000e+00> : vector<16xf32>
    %8 = vector.multi_reduction <add>, %7, %cst_2 [1] : vector<16x32xf32> to vector<16xf32>
    %9 = vector.shape_cast %8 : vector<16xf32> to vector<16x1xf32>
    %cst_3 = arith.constant 3.125000e-02 : f32
    %10 = vector.broadcast %cst_3 : f32 to vector<16x1xf32>
    %11 = arith.mulf %9, %10 : vector<16x1xf32>
    %cst_4 = arith.constant 9.99999996E-13 : f32
    %12 = vector.broadcast %cst_4 : f32 to vector<16x1xf32>
    %13 = arith.addf %11, %12 : vector<16x1xf32>
    %14 = tpu.reciprocal %13 : vector<16x1xf32> -> vector<16x1xf32>
    %15 = vector.broadcast %14 : vector<16x1xf32> to vector<16x32xf32>
    %16 = arith.mulf %6, %15 : vector<16x32xf32>
    %c0_5 = arith.constant 0 : index
    %c0_6 = arith.constant 0 : index
    %17 = vector.load %arg2[%c0_5, %c0_6] : memref<1x32xf32, #tpu.memory_space<vmem>>, vector<1x32xf32>
    %18 = vector.broadcast %17 : vector<1x32xf32> to vector<16x32xf32>
    %19 = arith.mulf %16, %18 : vector<16x32xf32>
    %c0_7 = arith.constant 0 : index
    %c0_8 = arith.constant 0 : index
    %20 = vector.load %arg3[%c0_7, %c0_8] : memref<1x32xf32, #tpu.memory_space<vmem>>, vector<1x32xf32>
    %21 = vector.broadcast %20 : vector<1x32xf32> to vector<16x32xf32>
    %22 = arith.addf %19, %21 : vector<16x32xf32>
    %c0_9 = arith.constant 0 : index
    %c0_10 = arith.constant 0 : index
    %23 = vector.load %arg4[%c0_9, %c0_10] : memref<16x32xf32, #tpu.memory_space<vmem>>, vector<16x32xf32>
    tpu.vector_store %arg4[%c0_9, %c0_10], %22 {strides = array<i32>} : memref<16x32xf32, #tpu.memory_space<vmem>>, vector<16x32xf32>,
    return
  }
  func.func @transform_0(%arg0: i32) -> (i32, i32) {
    %c0_i32 = arith.constant 0 : i32
    %c0_i32_0 = arith.constant 0 : i32
    return %arg0, %c0_i32 : i32, i32
  }
  func.func @transform_1(%arg0: i32) -> (i32, i32) {
    %c0_i32 = arith.constant 0 : i32
    %c0_i32_0 = arith.constant 0 : i32
    %c0_i32_1 = arith.constant 0 : i32
    return %c0_i32, %c0_i32_0 : i32, i32
  }
  func.func @transform_2(%arg0: i32) -> (i32, i32) {
    %c0_i32 = arith.constant 0 : i32
    %c0_i32_0 = arith.constant 0 : i32
    %c0_i32_1 = arith.constant 0 : i32
    return %c0_i32, %c0_i32_0 : i32, i32
  }
  func.func @transform_3(%arg0: i32) -> (i32, i32) {
    %c0_i32 = arith.constant 0 : i32
    %c0_i32_0 = arith.constant 0 : i32
    return %arg0, %c0_i32 : i32, i32
  }
}

</mosaic_0001>

<llo_original>
// kernel: tpu_custom_call.1
$region0: #{tpu_custom_call.1}
  #allocation0 [shape = 'u32[]', space=smem, size = 0x4, offset = 0x4, fixed_abs, tag = 'smem constant byte address 0x4 - core index']
  #allocation1 [shape = 'u32[144,128]{1,0:T(1,128)}', space=vmem, size = 0x12000, scoped, tag = 'internal scratch']
  %s0 = inlined_call_operand.hbm [shape: f32[16,32], index: 0, kind: input, shape index: {}]
  %s1 = inlined_call_operand.vmem [shape: f32[1,32], index: 1, kind: input, shape index: {}]
  %s2 = inlined_call_operand.vmem [shape: f32[1,32], index: 2, kind: input, shape index: {}]
  %s3 = inlined_call_operand.hbm [shape: f32[16,32], index: 3, kind: output, shape index: {}]
  %s4 = sld [smem:[#allocation0]]
  $region26: #{tpu_custom_call.1} parent=0
    _
  %s6 = ssub.s32 1, %s4
  %s7 = scalar_select 0, %s6, %s4
  $region1: #{tpu_custom_call.1} parent=0
    #allocation2 [shape = 'u8[8192]{0}', space=vmem, size = 0x2000, scoped, tag = 'input window, operand 0, single buffered']
    #allocation3 [shape = 's32[1]{0}', space=sflag, size = 0x4, scoped, tag = 'scoped memory for tpu_custom_call.1']
    #allocation4 [shape = 's32[1]{0}', space=sflag, size = 0x4, scoped, tag = 'scoped memory for tpu_custom_call.1']
    #allocation5 [shape = 'u8[8192]{0}', space=vmem, size = 0x2000, scoped, tag = 'output window, operand 0, single buffered']
    %8 = vsyncpa [#allocation3], 0
    %9 = vsyncpa [#allocation4], 0
    // Predicated region
    $region2: #{tpu_custom_call.1} parent=1 // pred_check
      _
    $region3: #{tpu_custom_call.1} parent=1 // pred_check_branch
      %11 = sbr.rel (0) target = $region5
    $region4: #{tpu_custom_call.1} parent=1 // pred_region
      %s13 = ssub.s32 256, 256
      %14 = vsyncadd [#allocation3], %s13
      %s15 = sshll.u32 [#allocation2], 4
      %s16 = int_to_ptr.vmem [resolvable:$true] %s15
      %21 = dma.hbm_to_vmem [thread:$0]  %s0, 256, %s16, [#allocation3], 128, 128, 8
    $region5: #{tpu_custom_call.1} parent=1 // pred_fallthru
      _
    // Predicated region
    $region6: #{tpu_custom_call.1} parent=1 // pred_check
      _
    $region7: #{tpu_custom_call.1} parent=1 // pred_check_branch
      %23 = sbr.rel (0) target = $region9
    $region8: #{tpu_custom_call.1} parent=1 // pred_region
      _
    $region9: #{tpu_custom_call.1} parent=1 // pred_fallthru
      _
    // Predicated region
    $region10: #{tpu_custom_call.1} parent=1 // pred_check
      _
    $region11: #{tpu_custom_call.1} parent=1 // pred_check_branch
      %25 = sbr.rel (0) target = $region13
    $region12: #{tpu_custom_call.1} parent=1 // pred_region
      _
    $region13: #{tpu_custom_call.1} parent=1 // pred_fallthru
      _
    // Predicated region
    $region14: #{tpu_custom_call.1} parent=1 // pred_check
      _
    $region15: #{tpu_custom_call.1} parent=1 // pred_check_branch
      %27 = sbr.rel (0) target = $region17
    $region16: #{tpu_custom_call.1} parent=1 // pred_region
      %28 = dma.done [#allocation3], 256
    $region17: #{tpu_custom_call.1} parent=1 // pred_fallthru
      _
    %v29 = vld [vmem:[#allocation2] sm:$0xff]
    %v30 = vld [vmem:[#allocation2 + $0x8] sm:$0xff]
    %vm31 = vcmask 261120
    %v32 = vsel %vm31, %v29, 0.0
    %33 = vadd.xlane.f32.xlu0 %v32
    %v34 = vpop.xlane.xlu0 %33
    %v35 = vsel %vm31, %v30, 0.0
    %36 = vadd.xlane.f32.xlu0 %v35
    %v37 = vpop.xlane.xlu0 %36
    %v38 = vmul.f32 %v34, 0.03125
    %v39 = vmul.f32 %v37, 0.03125
    %v40 = vsub.f32 %v29, %v38
    %v41 = vsub.f32 %v30, %v39
    %v42 = vmul.f32 %v40, %v40
    %v43 = vmul.f32 %v41, %v41
    %v44 = vsel %vm31, %v42, 0.0
    %45 = vadd.xlane.f32.xlu0 %v44
    %v46 = vpop.xlane.xlu0 %45
    %v47 = vsel %vm31, %v43, 0.0
    %48 = vadd.xlane.f32.xlu0 %v47
    %v49 = vpop.xlane.xlu0 %48
    %v50 = vmul.f32 %v46, 0.03125
    %v51 = vmul.f32 %v49, 0.03125
    %v52 = vadd.f32 %v50, 1e-12
    %v53 = vadd.f32 %v51, 1e-12
    %v54 = vrcp.pop %v52
    %v55 = vrcp.pop %v53
    %v56 = vmul.f32 %v40, %v54
    %v57 = vmul.f32 %v41, %v55
    %v58 = vld [vmem:[%s1] sm:$0x1]
    %v60 = vlaneseq
    %v61 = vshrl.u32 %v60, 7
    %v62 = vsub.s32 0, %v61
    %v63 = vrot.slane %v58, %v62
    %v65 = vmul.f32 %v56, %v63
    %v66 = vmul.f32 %v57, %v63
    %v67 = vld [vmem:[%s2] sm:$0x1]
    %v69 = vlaneseq
    %v70 = vshrl.u32 %v69, 7
    %v71 = vsub.s32 0, %v70
    %v72 = vrot.slane %v67, %v71
    %v74 = vadd.f32 %v65, %v72
    %v75 = vadd.f32 %v66, %v72
    %76 = vst.msk [vmem:[#allocation5] sm:$0xff] %vm31, %v74
    %77 = vst.msk [vmem:[#allocation5 + $0x8] sm:$0xff] %vm31, %v75
    // Predicated region
    $region18: #{tpu_custom_call.1} parent=1 // pred_check
      _
    $region19: #{tpu_custom_call.1} parent=1 // pred_check_branch
      %79 = sbr.rel (0) target = $region21
    $region20: #{tpu_custom_call.1} parent=1 // pred_region
      %s81 = ssub.s32 256, 256
      %82 = vsyncadd [#allocation4], %s81
      %s83 = sshll.u32 [#allocation5], 4
      %s84 = int_to_ptr.vmem [resolvable:$true] %s83
      %89 = dma.vmem_to_hbm [thread:$0]  %s84, 256, %s3, [#allocation4], 128, 128, 8
    $region21: #{tpu_custom_call.1} parent=1 // pred_fallthru
      _
    // Predicated region
    $region22: #{tpu_custom_call.1} parent=1 // pred_check
      _
    $region23: #{tpu_custom_call.1} parent=1 // pred_check_branch
      %91 = sbr.rel (0) target = $region25
    $region24: #{tpu_custom_call.1} parent=1 // pred_region
      %92 = dma.done [#allocation4], 256
    $region25: #{tpu_custom_call.1} parent=1 // pred_fallthru
      _
    %93 = vsyncpa [#allocation3], 1
    %94 = vsyncpa [#allocation4], 1

</llo_original>
